<compile_context>
chip_gen: v6e
topology: v6e:2x2x1
jax: 0.10.0
libtpu: 0.0.40
codegen_flags: <defaults>
</compile_context>

<pallas_src>
import functools

import jax
import jax.numpy as jnp
from jax.experimental import pallas as pl
from jax.experimental.pallas import tpu as pltpu

_LANES = 128
_TILE_ROWS = 8192    # 8192*128*4B = 4 MiB per f32 input block
_ACC_ROWS = 64       # 8 independent accumulator vregs (32 KiB scratch)
_NUM_CORES = 2       # leading grid axis; both TCs on v7x, sequential elsewhere


def _tile_sq_rel_diff(p_ref, t_ref, epsilon, mask=None):
    """Squared relative diffs for one tile (optionally row-masked)."""
    p = p_ref[...].astype(jnp.float32)
    t = t_ref[...].astype(jnp.float32)
    denom = t + jnp.float32(epsilon)
    # EUP approximate reciprocal + one Newton step (rel. err ~1e-7).
    inv = pl.reciprocal(denom, approx=True)
    inv = inv * (jnp.float32(2.0) - denom * inv)
    rd = (p - t) * inv
    if mask is not None:
        rd = jnp.where(mask, rd, jnp.float32(0.0))
    return rd * rd


def _accumulate(acc_ref, rd2, tile_rows, acc_rows):
    """Fold a (tile_rows, 128) tile into the (acc_rows, 128) accumulator."""
    main = (tile_rows // acc_rows) * acc_rows
    if main:
        acc_ref[...] += jnp.sum(
            rd2[:main].reshape(main // acc_rows, acc_rows, _LANES), axis=0)
    rem = tile_rows - main
    if rem:
        acc_ref[0:rem, :] += rd2[main:, :]


def _loss_kernel(p_ref, t_ref, o_ref, acc_ref, *, epsilon, valid_rows,
                 tiles_per_core, tile_rows, acc_rows):
    c = pl.program_id(0)   # core split (maps to a TensorCore on megacore)
    i = pl.program_id(1)   # row-tile index within this core's range

    @pl.when(i == 0)
    def _():
        acc_ref[...] = jnp.zeros_like(acc_ref)

    block_row_start = (c * tiles_per_core + i) * tile_rows
    is_full = block_row_start + tile_rows <= valid_rows
    is_partial = jnp.logical_and(jnp.logical_not(is_full),
                                 block_row_start < valid_rows)

    # Hot path: fully valid tile, no masking work at all.
    @pl.when(is_full)
    def _():
        rd2 = _tile_sq_rel_diff(p_ref, t_ref, epsilon)
        _accumulate(acc_ref, rd2, tile_rows, acc_rows)

    # Cold path: at most one partial tile per core pays for the row mask.
    # Fully out-of-range (clamped duplicate) tiles skip compute entirely.
    @pl.when(is_partial)
    def _():
        row_ids = jax.lax.broadcasted_iota(jnp.int32, (tile_rows, _LANES), 0)
        mask = (block_row_start + row_ids) < valid_rows
        rd2 = _tile_sq_rel_diff(p_ref, t_ref, epsilon, mask=mask)
        _accumulate(acc_ref, rd2, tile_rows, acc_rows)

    @pl.when(i == pl.num_programs(1) - 1)
    def _():
        # One cross-lane reduce per core: partial sum of squares.
        o_ref[0, 0] = jnp.sum(acc_ref[...])


def scaled_l2_relative_error_loss(predictions, targets, epsilon=1e-8,
                                  scale_factor=1.0):
    assert predictions.shape == targets.shape

    p_flat = predictions.reshape(-1)
    t_flat = targets.reshape(-1)
    n = p_flat.shape[0]

    # Tail (< 128 elements) is handled in pure JAX: avoids materializing
    # padded full-array copies of both inputs in HBM.
    n_main = (n // _LANES) * _LANES
    if n_main < n:
        pt = p_flat[n_main:].astype(jnp.float32)
        tt = t_flat[n_main:].astype(jnp.float32)
        rdt = (pt - tt) / (tt + jnp.float32(epsilon))
        tail_ss = jnp.sum(rdt * rdt)
    else:
        tail_ss = jnp.float32(0.0)

    if n_main == 0:
        # Degenerate case: fewer than 128 elements total.
        total_ss = tail_ss
    else:
        rows = n_main // _LANES
        p2 = p_flat[:n_main].reshape(rows, _LANES)
        t2 = t_flat[:n_main].reshape(rows, _LANES)

        # If everything fits in one block, use a full-extent block (always a
        # legal block shape) instead of a block larger than the array.
        tile_rows = _TILE_ROWS if rows > _TILE_ROWS else rows
        total_tiles = pl.cdiv(rows, tile_rows)
        num_cores = min(_NUM_CORES, total_tiles)
        tiles_per_core = pl.cdiv(total_tiles, num_cores)
        last_tile = total_tiles - 1

        def in_index_map(c, i):
            # Clamp so the DMA never starts past the array; clamped duplicate
            # tiles are skipped inside the kernel and contribute zero.
            return (jnp.minimum(c * tiles_per_core + i, last_tile), 0)

        kernel = functools.partial(
            _loss_kernel,
            epsilon=epsilon,
            valid_rows=rows,
            tiles_per_core=tiles_per_core,
            tile_rows=tile_rows,
            acc_rows=_ACC_ROWS,
        )

        # 2 inputs x 2 pipeline buffers per tile, plus scratch/headroom.
        in_bytes_per_step = tile_rows * _LANES * (
            p2.dtype.itemsize + t2.dtype.itemsize)
        vmem_limit = max(2 * in_bytes_per_step + (4 << 20), 16 << 20)

        partials = pl.pallas_call(
            kernel,
            out_shape=jax.ShapeDtypeStruct((num_cores, 1), jnp.float32),
            grid_spec=pltpu.PrefetchScalarGridSpec(
                num_scalar_prefetch=0,
                grid=(num_cores, tiles_per_core),
                in_specs=[
                    pl.BlockSpec((tile_rows, _LANES), in_index_map),
                    pl.BlockSpec((tile_rows, _LANES), in_index_map),
                ],
                out_specs=pl.BlockSpec(
                    (1, 1), lambda c, i: (c, 0),
                    memory_space=pltpu.MemorySpace.SMEM),
                scratch_shapes=[pltpu.VMEM((_ACC_ROWS, _LANES), jnp.float32)],
            ),
            compiler_params=pltpu.CompilerParams(
                # TODO(synk): on v7x, if xprof shows a single busy TC, switch
                # the leading axis to pltpu.CORE_PARALLEL.
                dimension_semantics=("parallel", "arbitrary"),
                vmem_limit_bytes=int(vmem_limit),
            ),
            cost_estimate=pl.CostEstimate(
                flops=7 * n_main,
                transcendentals=n_main,
                bytes_accessed=n_main * (p2.dtype.itemsize
                                         + t2.dtype.itemsize),
            ),
        )(p2, t2)

        total_ss = jnp.sum(partials) + tail_ss

    # Tiny epilogue: sqrt + scale.
    return jnp.sqrt(total_ss) * jnp.float32(scale_factor)


def _reference(predictions, targets, epsilon=1e-8, scale_factor=1.0):
    rd = (predictions - targets) / (targets + epsilon)
    return jnp.sqrt(jnp.sum(rd * rd)) * scale_factor


if __name__ == "__main__":
    key = jax.random.PRNGKey(0)
    kp, kt = jax.random.split(key)
    # Small NCHW-shaped inputs consistent with typical use of this loss.
    x_shape = (2, 4, 16, 16)
    predictions = jax.random.normal(kp, x_shape, dtype=jnp.float32)
    targets = jax.random.normal(kt, x_shape, dtype=jnp.float32) + 1.5

    loss = scaled_l2_relative_error_loss(
        predictions, targets, epsilon=1e-8, scale_factor=1.0
    )
    jax.block_until_ready(loss)

    ref = _reference(predictions, targets, epsilon=1e-8, scale_factor=1.0)
    assert jnp.allclose(loss, ref, rtol=1e-5, atol=1e-5), (loss, ref)
    print("KERNEL_OK")
</pallas_src>

<mosaic_0001>
module attributes {stable_mosaic.version = 11 : i64} {
  func.func @_loss_kernel(%arg0: i32, %arg1: i32, %arg2: memref<16x128xf32, #tpu.memory_space<vmem>>, %arg3: memref<16x128xf32, #tpu.memory_space<vmem>>, %arg4: memref<1x1xf32, #tpu.memory_space<smem>>, %arg5: memref<64x128xf32, #tpu.memory_space<vmem>>) attributes {dimension_semantics = [#tpu.dimension_semantics<parallel>, #tpu.dimension_semantics<arbitrary>], iteration_bounds = array<i64: 1, 1>, scalar_prefetch = 0 : i64, scratch_operands = 1 : i64, tpu.core_type = #tpu.core_type<tc>, window_params = [{transform_indices = @transform_0, window_bounds = array<i64: 16, 128>}, {transform_indices = @transform_1, window_bounds = array<i64: 16, 128>}, {transform_indices = @transform_2, window_bounds = array<i64: 1, 1>}]} {
    %c0_i32 = arith.constant 0 : i32
    %0 = arith.cmpi eq, %arg1, %c0_i32 : i32
    %1 = arith.extui %0 : i1 to i32
    %c0_i32_0 = arith.constant 0 : i32
    %2 = arith.cmpi ne, %1, %c0_i32_0 : i32
    scf.if %2 {
      %cst = arith.constant 0.000000e+00 : f32
      %18 = vector.broadcast %cst : f32 to vector<64x128xf32>
      %c0 = arith.constant 0 : index
      %c0_8 = arith.constant 0 : index
      %19 = vector.load %arg5[%c0, %c0_8] : memref<64x128xf32, #tpu.memory_space<vmem>>, vector<64x128xf32>
      tpu.vector_store %arg5[%c0, %c0_8], %18 {strides = array<i32>} : memref<64x128xf32, #tpu.memory_space<vmem>>, vector<64x128xf32>,
    } else {
    }
    %c1_i32 = arith.constant 1 : i32
    %3 = arith.muli %arg0, %c1_i32 : i32
    %4 = arith.addi %3, %arg1 : i32
    %c16_i32 = arith.constant 16 : i32
    %5 = arith.muli %4, %c16_i32 : i32
    %c16_i32_1 = arith.constant 16 : i32
    %6 = arith.addi %5, %c16_i32_1 : i32
    %c16_i32_2 = arith.constant 16 : i32
    %7 = arith.cmpi sle, %6, %c16_i32_2 : i32
    %true = arith.constant true
    %8 = arith.xori %7, %true : i1
    %c16_i32_3 = arith.constant 16 : i32
    %9 = arith.cmpi slt, %5, %c16_i32_3 : i32
    %10 = arith.andi %8, %9 : i1
    %11 = arith.extui %7 : i1 to i32
    %c0_i32_4 = arith.constant 0 : i32
    %12 = arith.cmpi ne, %11, %c0_i32_4 : i32
    scf.if %12 {
      %c0 = arith.constant 0 : index
      %c0_8 = arith.constant 0 : index
      %18 = vector.load %arg2[%c0, %c0_8] : memref<16x128xf32, #tpu.memory_space<vmem>>, vector<16x128xf32>
      %c0_9 = arith.constant 0 : index
      %c0_10 = arith.constant 0 : index
      %19 = vector.load %arg3[%c0_9, %c0_10] : memref<16x128xf32, #tpu.memory_space<vmem>>, vector<16x128xf32>
      %cst = arith.constant 9.99999993E-9 : f32
      %20 = vector.broadcast %cst : f32 to vector<16x128xf32>
      %21 = arith.addf %19, %20 : vector<16x128xf32>
      %22 = tpu.reciprocal %21 {approx = true} : vector<16x128xf32> -> vector<16x128xf32>
      %23 = arith.mulf %21, %22 : vector<16x128xf32>
      %cst_11 = arith.constant 2.000000e+00 : f32
      %24 = vector.broadcast %cst_11 : f32 to vector<16x128xf32>
      %25 = arith.subf %24, %23 : vector<16x128xf32>
      %26 = arith.mulf %22, %25 : vector<16x128xf32>
      %27 = arith.subf %18, %19 : vector<16x128xf32>
      %28 = arith.mulf %27, %26 : vector<16x128xf32>
      %29 = arith.mulf %28, %28 : vector<16x128xf32>
      %c0_12 = arith.constant 0 : index
      %c0_13 = arith.constant 0 : index
      %30 = vector.load %arg5[%c0_12, %c0_13] : memref<64x128xf32, #tpu.memory_space<vmem>>, vector<16x128xf32>
      %31 = arith.addf %30, %29 : vector<16x128xf32>
      %c0_14 = arith.constant 0 : index
      %c0_15 = arith.constant 0 : index
      %32 = vector.load %arg5[%c0_14, %c0_15] : memref<64x128xf32, #tpu.memory_space<vmem>>, vector<16x128xf32>
      tpu.vector_store %arg5[%c0_14, %c0_15], %31 {strides = array<i32>} : memref<64x128xf32, #tpu.memory_space<vmem>>, vector<16x128xf32>,
    } else {
    }
    %13 = arith.extui %10 : i1 to i32
    %c0_i32_5 = arith.constant 0 : i32
    %14 = arith.cmpi ne, %13, %c0_i32_5 : i32
    scf.if %14 {
      %18 = tpu.iota {dimensions = array<i32: 0>} : vector<16x128xi32>
      %19 = vector.broadcast %5 : i32 to vector<16x128xi32>
      %20 = arith.addi %19, %18 : vector<16x128xi32>
      %c16_i32_8 = arith.constant 16 : i32
      %21 = vector.broadcast %c16_i32_8 : i32 to vector<16x128xi32>
      %22 = arith.cmpi slt, %20, %21 : vector<16x128xi32>
      %c0 = arith.constant 0 : index
      %c0_9 = arith.constant 0 : index
      %23 = vector.load %arg2[%c0, %c0_9] : memref<16x128xf32, #tpu.memory_space<vmem>>, vector<16x128xf32>
      %c0_10 = arith.constant 0 : index
      %c0_11 = arith.constant 0 : index
      %24 = vector.load %arg3[%c0_10, %c0_11] : memref<16x128xf32, #tpu.memory_space<vmem>>, vector<16x128xf32>
      %cst = arith.constant 9.99999993E-9 : f32
      %25 = vector.broadcast %cst : f32 to vector<16x128xf32>
      %26 = arith.addf %24, %25 : vector<16x128xf32>
      %27 = tpu.reciprocal %26 {approx = true} : vector<16x128xf32> -> vector<16x128xf32>
      %28 = arith.mulf %26, %27 : vector<16x128xf32>
      %cst_12 = arith.constant 2.000000e+00 : f32
      %29 = vector.broadcast %cst_12 : f32 to vector<16x128xf32>
      %30 = arith.subf %29, %28 : vector<16x128xf32>
      %31 = arith.mulf %27, %30 : vector<16x128xf32>
      %32 = arith.subf %23, %24 : vector<16x128xf32>
      %33 = arith.mulf %32, %31 : vector<16x128xf32>
      %cst_13 = arith.constant 0.000000e+00 : f32
      %34 = vector.broadcast %cst_13 : f32 to vector<16x128xf32>
      %35 = arith.select %22, %33, %34 : vector<16x128xi1>, vector<16x128xf32>
      %36 = arith.mulf %35, %35 : vector<16x128xf32>
      %c0_14 = arith.constant 0 : index
      %c0_15 = arith.constant 0 : index
      %37 = vector.load %arg5[%c0_14, %c0_15] : memref<64x128xf32, #tpu.memory_space<vmem>>, vector<16x128xf32>
      %38 = arith.addf %37, %36 : vector<16x128xf32>
      %c0_16 = arith.constant 0 : index
      %c0_17 = arith.constant 0 : index
      %39 = vector.load %arg5[%c0_16, %c0_17] : memref<64x128xf32, #tpu.memory_space<vmem>>, vector<16x128xf32>
      tpu.vector_store %arg5[%c0_16, %c0_17], %38 {strides = array<i32>} : memref<64x128xf32, #tpu.memory_space<vmem>>, vector<16x128xf32>,
    } else {
    }
    %c0_i32_6 = arith.constant 0 : i32
    %15 = arith.cmpi eq, %arg1, %c0_i32_6 : i32
    %16 = arith.extui %15 : i1 to i32
    %c0_i32_7 = arith.constant 0 : i32
    %17 = arith.cmpi ne, %16, %c0_i32_7 : i32
    scf.if %17 {
      %c0 = arith.constant 0 : index
      %c0_8 = arith.constant 0 : index
      %18 = vector.load %arg5[%c0, %c0_8] : memref<64x128xf32, #tpu.memory_space<vmem>>, vector<64x128xf32>
      %19 = vector.shape_cast %18 : vector<64x128xf32> to vector<1x64x128xf32>
      %cst = arith.constant dense<0.000000e+00> : vector<1xf32>
      %20 = vector.multi_reduction <add>, %19, %cst [1, 2] : vector<1x64x128xf32> to vector<1xf32>
      %21 = vector.shape_cast %20 : vector<1xf32> to vector<1x1x1xf32>
      %22 = vector.extract %21[0, 0, 0] : f32 from vector<1x1x1xf32>
      %c0_9 = arith.constant 0 : index
      %c0_10 = arith.constant 0 : index
      %23 = memref.load %arg4[%c0_9, %c0_10] : memref<1x1xf32, #tpu.memory_space<smem>>
      memref.store %22, %arg4[%c0_9, %c0_10] : memref<1x1xf32, #tpu.memory_space<smem>>
    } else {
    }
    return
  }
  func.func @transform_0(%arg0: i32, %arg1: i32) -> (i32, i32) {
    %c1_i32 = arith.constant 1 : i32
    %0 = arith.muli %arg0, %c1_i32 : i32
    %1 = arith.addi %0, %arg1 : i32
    %c0_i32 = arith.constant 0 : i32
    %2 = arith.minsi %1, %c0_i32 : i32
    %c0_i32_0 = arith.constant 0 : i32
    %c0_i32_1 = arith.constant 0 : i32
    return %2, %c0_i32_0 : i32, i32
  }
  func.func @transform_1(%arg0: i32, %arg1: i32) -> (i32, i32) {
    %c1_i32 = arith.constant 1 : i32
    %0 = arith.muli %arg0, %c1_i32 : i32
    %1 = arith.addi %0, %arg1 : i32
    %c0_i32 = arith.constant 0 : i32
    %2 = arith.minsi %1, %c0_i32 : i32
    %c0_i32_0 = arith.constant 0 : i32
    %c0_i32_1 = arith.constant 0 : i32
    return %2, %c0_i32_0 : i32, i32
  }
  func.func @transform_2(%arg0: i32, %arg1: i32) -> (i32, i32) {
    %c0_i32 = arith.constant 0 : i32
    %c0_i32_0 = arith.constant 0 : i32
    return %arg0, %c0_i32 : i32, i32
  }
}

</mosaic_0001>

<llo_original>
// kernel: tpu_custom_call.1
$region0: #{tpu_custom_call.1}
  #allocation0 [shape = 'u32[]', space=smem, size = 0x4, offset = 0x4, fixed_abs, tag = 'smem constant byte address 0x4 - core index']
  #allocation1 [shape = 'u32[144,128]{1,0:T(1,128)}', space=vmem, size = 0x12000, scoped, tag = 'internal scratch']
  #allocation2 [shape = 'f32[64,128]{1,0:T(8,128)}', space=vmem, size = 0x8000, scoped, tag = 'scratch operand']
  %s0 = inlined_call_operand.hbm [shape: f32[16,128], index: 0, kind: input, shape index: {}]
  %s1 = inlined_call_operand.hbm [shape: f32[16,128], index: 1, kind: input, shape index: {}]
  %s2 = inlined_call_operand.hbm [shape: f32[1,1], index: 2, kind: output, shape index: {}]
  %s3 = sld [smem:[#allocation0]]
  $region42: #{tpu_custom_call.1} parent=0
    _
  %s5 = ssub.s32 1, %s3
  %s6 = scalar_select 0, %s5, %s3
  $region1: #{tpu_custom_call.1} parent=0
    #allocation3 [shape = 'u8[8192]{0}', space=vmem, size = 0x2000, scoped, tag = 'input window, operand 0, single buffered']
    #allocation4 [shape = 's32[1]{0}', space=sflag, size = 0x4, scoped, tag = 'scoped memory for tpu_custom_call.1']
    #allocation5 [shape = 's32[1]{0}', space=sflag, size = 0x4, scoped, tag = 'scoped memory for tpu_custom_call.1']
    #allocation6 [shape = 'u8[8192]{0}', space=vmem, size = 0x2000, scoped, tag = 'input window, operand 1, single buffered']
    #allocation7 [shape = 's32[1]{0}', space=sflag, size = 0x4, scoped, tag = 'scoped memory for tpu_custom_call.1']
    #allocation8 [shape = 'u8[512]{0}', space=smem, size = 0x200, scoped, tag = 'output window, operand 0, single buffered']
    %7 = vsyncpa [#allocation4], 0
    %8 = vsyncpa [#allocation7], 0
    %9 = vsyncpa [#allocation5], 0
    // Predicated region
    $region2: #{tpu_custom_call.1} parent=1 // pred_check
      _
    $region3: #{tpu_custom_call.1} parent=1 // pred_check_branch
      %11 = sbr.rel (0) target = $region5
    $region4: #{tpu_custom_call.1} parent=1 // pred_region
      %s12 = sadd.s32 0, 0
      %p13 = scmp.lt.s32.totalorder %s12, 0
      %s14 = scalar_select %p13, %s12, 0
      %s15 = smul.u32 2, %s14
      %s17 = ssub.s32 256, 256
      %18 = vsyncadd [#allocation4], %s17
      %s19 = smul.addr %s15, 128
      %s20 = scalar_lea.hbm %s0, %s19
      %s21 = sshll.u32 [#allocation3], 4
      %s22 = int_to_ptr.vmem [resolvable:$true] %s21
      %27 = dma.hbm_to_vmem [thread:$0]  %s20, 256, %s22, [#allocation4], 128, 128, 8
    $region5: #{tpu_custom_call.1} parent=1 // pred_fallthru
      _
    // Predicated region
    $region6: #{tpu_custom_call.1} parent=1 // pred_check
      _
    $region7: #{tpu_custom_call.1} parent=1 // pred_check_branch
      %29 = sbr.rel (0) target = $region9
    $region8: #{tpu_custom_call.1} parent=1 // pred_region
      %s30 = sadd.s32 0, 0
      %p31 = scmp.lt.s32.totalorder %s30, 0
      %s32 = scalar_select %p31, %s30, 0
      %s33 = smul.u32 2, %s32
      %s35 = ssub.s32 256, 256
      %36 = vsyncadd [#allocation7], %s35
      %s37 = smul.addr %s33, 128
      %s38 = scalar_lea.hbm %s1, %s37
      %s39 = sshll.u32 [#allocation6], 4
      %s40 = int_to_ptr.vmem [resolvable:$true] %s39
      %45 = dma.hbm_to_vmem [thread:$0]  %s38, 256, %s40, [#allocation7], 128, 128, 8
    $region9: #{tpu_custom_call.1} parent=1 // pred_fallthru
      _
    // Predicated region
    $region10: #{tpu_custom_call.1} parent=1 // pred_check
      _
    $region11: #{tpu_custom_call.1} parent=1 // pred_check_branch
      %47 = sbr.rel (0) target = $region13
    $region12: #{tpu_custom_call.1} parent=1 // pred_region
      %48 = dma.done [#allocation4], 256
    $region13: #{tpu_custom_call.1} parent=1 // pred_fallthru
      _
    // Predicated region
    $region14: #{tpu_custom_call.1} parent=1 // pred_check
      _
    $region15: #{tpu_custom_call.1} parent=1 // pred_check_branch
      %50 = sbr.rel (0) target = $region17
    $region16: #{tpu_custom_call.1} parent=1 // pred_region
      %51 = dma.done [#allocation7], 256
    $region17: #{tpu_custom_call.1} parent=1 // pred_fallthru
      _
    %s52 = sadd.s32 0, 0
    %p53 = scmp.lt.s32.totalorder %s52, 0
    %s54 = scalar_select %p53, %s52, 0
    %s55 = smul.u32 2, %s54
    %s56 = sadd.s32 0, 0
    %p57 = scmp.lt.s32.totalorder %s56, 0
    %s58 = scalar_select %p57, %s56, 0
    %s59 = smul.u32 2, %s58
    %p60 = scmp.eq.s32.totalorder 0, 0
    // Predicated region
    $region18: #{tpu_custom_call.1} parent=1 // pred_check
      %p61 = pneg %p60
    $region19: #{tpu_custom_call.1} parent=1 // pred_check_branch
      %63 = sbr.rel (%p61) target = $region21
    $region20: #{tpu_custom_call.1} parent=1 // pred_region
      %64 = vst [vmem:[#allocation2] sm:$0xff] 0.0
      %65 = vst [vmem:[#allocation2 + $0x8] sm:$0xff] 0.0
      %66 = vst [vmem:[#allocation2 + $0x10] sm:$0xff] 0.0
      %67 = vst [vmem:[#allocation2 + $0x18] sm:$0xff] 0.0
      %68 = vst [vmem:[#allocation2 + $0x20] sm:$0xff] 0.0
      %69 = vst [vmem:[#allocation2 + $0x28] sm:$0xff] 0.0
      %70 = vst [vmem:[#allocation2 + $0x30] sm:$0xff] 0.0
      %71 = vst [vmem:[#allocation2 + $0x38] sm:$0xff] 0.0
    $region21: #{tpu_custom_call.1} parent=1 // pred_fallthru
      _
    %s72 = sadd.s32 0, 0
    %s73 = smul.u32 %s72, 16
    %s74 = sadd.s32 %s73, 16
    %p75 = scmp.le.s32.totalorder %s74, 16
    %p76 = scmp.gt.s32.totalorder %s74, 16
    %p77 = scmp.lt.s32.totalorder %s73, 16
    %p78 = pnand %p76, %p77
    %p79 = pneg %p78
    // Predicated region
    $region22: #{tpu_custom_call.1} parent=1 // pred_check
      %p80 = pneg %p75
    $region23: #{tpu_custom_call.1} parent=1 // pred_check_branch
      %82 = sbr.rel (%p80) target = $region25
    $region24: #{tpu_custom_call.1} parent=1 // pred_region
      %v83 = vld [vmem:[#allocation3] sm:$0xff]
      %v84 = vld [vmem:[#allocation3 + $0x8] sm:$0xff]
      %v85 = vld [vmem:[#allocation6] sm:$0xff]
      %v86 = vld [vmem:[#allocation6 + $0x8] sm:$0xff]
      %v87 = vadd.f32 %v85, 1e-08
      %v88 = vadd.f32 %v86, 1e-08
      %v89 = vrcp.pop %v87
      %v90 = vrcp.pop %v88
      %v91 = vmul.f32 %v87, %v89
      %v92 = vmul.f32 %v88, %v90
      %v93 = vsub.f32 2.0, %v91
      %v94 = vsub.f32 2.0, %v92
      %v95 = vmul.f32 %v89, %v93
      %v96 = vmul.f32 %v90, %v94
      %v97 = vsub.f32 %v83, %v85
      %v98 = vsub.f32 %v84, %v86
      %v99 = vmul.f32 %v97, %v95
      %v100 = vmul.f32 %v98, %v96
      %v101 = vmul.f32 %v99, %v99
      %v102 = vmul.f32 %v100, %v100
      %v103 = vld [vmem:[#allocation2] sm:$0xff]
      %v104 = vld [vmem:[#allocation2 + $0x8] sm:$0xff]
      %v105 = vadd.f32 %v103, %v101
      %v106 = vadd.f32 %v104, %v102
      %107 = vst [vmem:[#allocation2] sm:$0xff] %v105
      %108 = vst [vmem:[#allocation2 + $0x8] sm:$0xff] %v106
    $region25: #{tpu_custom_call.1} parent=1 // pred_fallthru
      _
    // Predicated region
    $region26: #{tpu_custom_call.1} parent=1 // pred_check
      _
    $region27: #{tpu_custom_call.1} parent=1 // pred_check_branch
      %110 = sbr.rel (%p78) target = $region29
    $region28: #{tpu_custom_call.1} parent=1 // pred_region
      %v111 = vlaneseq
      %v112 = vshrl.u32 %v111, 7
      %v113 = vadd.s32 %v112, 8
      %v114 = vstv %s73
      %v115 = vadd.s32 %v114, %v112
      %v116 = vadd.s32 %v114, %v113
      %vm117 = vcmp.lt.s32.totalorder %v115, 16
      %vm118 = vcmp.lt.s32.totalorder %v116, 16
      %v119 = vld [vmem:[#allocation3] sm:$0xff]
      %v120 = vld [vmem:[#allocation3 + $0x8] sm:$0xff]
      %v121 = vld [vmem:[#allocation6] sm:$0xff]
      %v122 = vld [vmem:[#allocation6 + $0x8] sm:$0xff]
      %v123 = vadd.f32 %v121, 1e-08
      %v124 = vadd.f32 %v122, 1e-08
      %v125 = vrcp.pop %v123
      %v126 = vrcp.pop %v124
      %v127 = vmul.f32 %v123, %v125
      %v128 = vmul.f32 %v124, %v126
      %v129 = vsub.f32 2.0, %v127
      %v130 = vsub.f32 2.0, %v128
      %v131 = vmul.f32 %v125, %v129
      %v132 = vmul.f32 %v126, %v130
      %v133 = vsub.f32 %v119, %v121
      %v134 = vsub.f32 %v120, %v122
      %v135 = vmul.f32 %v133, %v131
      %v136 = vmul.f32 %v134, %v132
      %v137 = vsel %vm117, %v135, 0.0
      %v138 = vsel %vm118, %v136, 0.0
      %v139 = vmul.f32 %v137, %v137
      %v140 = vmul.f32 %v138, %v138
      %v141 = vld [vmem:[#allocation2] sm:$0xff]
      %v142 = vld [vmem:[#allocation2 + $0x8] sm:$0xff]
      %v143 = vadd.f32 %v141, %v139
      %v144 = vadd.f32 %v142, %v140
      %145 = vst [vmem:[#allocation2] sm:$0xff] %v143
      %146 = vst [vmem:[#allocation2 + $0x8] sm:$0xff] %v144
    $region29: #{tpu_custom_call.1} parent=1 // pred_fallthru
      _
    // Predicated region
    $region30: #{tpu_custom_call.1} parent=1 // pred_check
      %p147 = pneg %p60
    $region31: #{tpu_custom_call.1} parent=1 // pred_check_branch
      %149 = sbr.rel (%p147) target = $region33
    $region32: #{tpu_custom_call.1} parent=1 // pred_region
      %v150 = vld [vmem:[#allocation2] sm:$0xff]
      %v151 = vld [vmem:[#allocation2 + $0x8] sm:$0xff]
      %v152 = vld [vmem:[#allocation2 + $0x10] sm:$0xff]
      %v153 = vld [vmem:[#allocation2 + $0x18] sm:$0xff]
      %v154 = vld [vmem:[#allocation2 + $0x20] sm:$0xff]
      %v155 = vld [vmem:[#allocation2 + $0x28] sm:$0xff]
      %v156 = vld [vmem:[#allocation2 + $0x30] sm:$0xff]
      %v157 = vld [vmem:[#allocation2 + $0x38] sm:$0xff]
      %v158 = vadd.f32 %v150, %v151
      %v159 = vadd.f32 %v158, %v152
      %v160 = vadd.f32 %v159, %v153
      %v161 = vadd.f32 %v160, %v154
      %v162 = vadd.f32 %v161, %v155
      %v163 = vadd.f32 %v162, %v156
      %v164 = vadd.f32 %v163, %v157
      %165 = vadd.xlane.f32.xlu0 %v164
      %v166 = vpop.xlane.xlu0 %165
      %v167 = vrot.slane %v166, 4
      %v168 = vadd.f32 %v166, %v167
      %v169 = vrot.slane %v168, 2
      %v170 = vadd.f32 %v168, %v169
      %v171 = vrot.slane %v170, 1
      %v172 = vadd.f32 %v170, %v171
      %s173 = vtos %v172
      %s174 = scalar_lea.smem [#allocation8], 0
      %175 = sst [smem:[%s174]] %s173
    $region33: #{tpu_custom_call.1} parent=1 // pred_fallthru
      _
    // Predicated region
    $region34: #{tpu_custom_call.1} parent=1 // pred_check
      _
    $region35: #{tpu_custom_call.1} parent=1 // pred_check_branch
      %177 = sbr.rel (0) target = $region37
    $region36: #{tpu_custom_call.1} parent=1 // pred_region
      %s179 = ssub.s32 16, 16
      %180 = vsyncadd [#allocation5], %s179
      %183 = dma.smem_to_hbm [#allocation8], 16, %s2, [#allocation5]
    $region37: #{tpu_custom_call.1} parent=1 // pred_fallthru
      _
    // Predicated region
    $region38: #{tpu_custom_call.1} parent=1 // pred_check
      _
    $region39: #{tpu_custom_call.1} parent=1 // pred_check_branch
      %185 = sbr.rel (0) target = $region41
    $region40: #{tpu_custom_call.1} parent=1 // pred_region
      %186 = dma.done [#allocation5], 16
    $region41: #{tpu_custom_call.1} parent=1 // pred_fallthru
      _
    %187 = sfence
    %188 = vsyncpa [#allocation4], 1
    %189 = vsyncpa [#allocation7], 1
    %190 = vsyncpa [#allocation5], 1

</llo_original>
